<compile_context>
chip_gen: v7x
topology: tpu7x:2x2x1
jax: 0.10.0
libtpu: 0.0.40
codegen_flags: <defaults>
</compile_context>

<pallas_src>
import numpy as np
import jax
import jax.numpy as jnp
from jax.experimental import pallas as pl
from jax.experimental.pallas import tpu as pltpu


# ---------------------------------------------------------------------------
# Fused kernel.
# Grid = (2, nd):  c in {0,1} selects the (teacher chunk c, student chunk 1-c)
# loss pair plus teacher chunk c+2 (center-sum only); d tiles out_dim.
# ---------------------------------------------------------------------------
def _dino_overlap_kernel(scales_ref, t_lo_ref, t_hi_ref, s_ref, center_ref,
                         rowloss_ref, colsum_ref,
                         mt_ref, zt_ref, w_ref, ms_ref, zs_ref):
    d = pl.program_id(1)
    nd = pl.num_programs(1)

    inv_t = scales_ref[0]   # 1 / teacher_temp
    inv_s = scales_ref[1]   # 1 / student_temp

    t_lo = t_lo_ref[...].astype(jnp.float32)    # teacher chunk c     (loss + center)
    t_hi = t_hi_ref[...].astype(jnp.float32)    # teacher chunk c + 2 (center only)
    s = s_ref[...].astype(jnp.float32)          # student chunk 1 - c
    ctr = center_ref[...].astype(jnp.float32)   # (1, TD)

    # --- center update: raw teacher column sum for this chunk pair / D tile ----
    colsum_ref[0] = (jnp.sum(t_lo, axis=0, keepdims=True)
                     + jnp.sum(t_hi, axis=0, keepdims=True))

    # --- online (streaming over D tiles) softmax / log-softmax statistics ------
    @pl.when(d == 0)
    def _init():
        mt_ref[...] = jnp.full(mt_ref.shape, -jnp.inf, jnp.float32)
        zt_ref[...] = jnp.zeros(zt_ref.shape, jnp.float32)
        w_ref[...] = jnp.zeros(w_ref.shape, jnp.float32)
        ms_ref[...] = jnp.full(ms_ref.shape, -jnp.inf, jnp.float32)
        zs_ref[...] = jnp.zeros(zs_ref.shape, jnp.float32)

    t_logits = (t_lo - ctr) * inv_t     # (B, TD) teacher logits (centered, scaled)
    s_logits = s * inv_s                # (B, TD) student logits (scaled)

    # teacher: running max / normalizer and running q-weighted sum of s_logits
    mt_new = jnp.maximum(mt_ref[...], jnp.max(t_logits, axis=-1, keepdims=True))
    alpha = jnp.exp(mt_ref[...] - mt_new)
    p = jnp.exp(t_logits - mt_new)
    zt_ref[...] = alpha * zt_ref[...] + jnp.sum(p, axis=-1, keepdims=True)
    w_ref[...] = alpha * w_ref[...] + jnp.sum(p * s_logits, axis=-1, keepdims=True)
    mt_ref[...] = mt_new

    # student: running logsumexp
    ms_new = jnp.maximum(ms_ref[...], jnp.max(s_logits, axis=-1, keepdims=True))
    beta = jnp.exp(ms_ref[...] - ms_new)
    zs_ref[...] = beta * zs_ref[...] + jnp.sum(jnp.exp(s_logits - ms_new),
                                               axis=-1, keepdims=True)
    ms_ref[...] = ms_new

    @pl.when(d == nd - 1)
    def _finalize():
        # per-row CE:  -sum_d q_d * log p_d  =  lse_s - (sum_d q_d * s_logits_d)
        lse_s = ms_ref[...] + jnp.log(zs_ref[...])
        rowloss_ref[...] = lse_s - w_ref[...] / zt_ref[...]


# ---------------------------------------------------------------------------
# block_d heuristic: largest divisor of D (multiple of 128) whose
# double-buffered working set stays well under the default scoped-VMEM limit.
# ---------------------------------------------------------------------------
def _pick_block_d(B, D, in_itemsize, requested=None):
    if requested is not None:
        assert D % requested == 0 and requested % 128 == 0
        return requested
    budget = 16 * 1024 * 1024   # conservative across v5e/v6e/v7x defaults
    # per-column bytes, double-buffered: t_lo + t_hi + s (B rows each, input
    # dtype) + center (1 row, input dtype) + colsum output (1 row, f32)
    bytes_per_col = 2 * ((3 * B + 1) * in_itemsize + 4)
    if bytes_per_col * D <= budget:
        return D
    best = 128
    cand = 128
    while cand <= D:
        if D % cand == 0 and bytes_per_col * cand <= budget:
            best = cand
        cand += 128
    return best


# ---------------------------------------------------------------------------
# Wrapper: one pallas_call + trivial combines.
# ---------------------------------------------------------------------------
def dino_loss_overlap_pallas(student_output, teacher_output, center,
                             teacher_temp, student_temp, center_momentum,
                             *, block_d=None):
    Nt, D = teacher_output.shape
    Ns, Ds = student_output.shape
    assert Ds == D and Ns == Nt, "student/teacher must have identical shapes"
    assert Nt % 4 == 0, "rows must be divisible by 4 (torch .chunk(4))"
    B = Nt // 4
    assert B % 8 == 0, "chunk size must be a multiple of 8 (f32 sublane tiling)"
    assert D % 128 == 0, "out_dim must be a multiple of 128 (lane tiling)"

    block_d = _pick_block_d(B, D, teacher_output.dtype.itemsize, block_d)
    nd = D // block_d

    scales = jnp.array([1.0 / teacher_temp, 1.0 / student_temp], jnp.float32)

    rowloss, colsum = pl.pallas_call(
        _dino_overlap_kernel,
        grid=(2, nd),
        in_specs=[
            pl.BlockSpec(memory_space=pltpu.MemorySpace.SMEM),        # scales (2,)
            pl.BlockSpec((B, block_d), lambda c, d: (c, d)),          # teacher chunk c
            pl.BlockSpec((B, block_d), lambda c, d: (c + 2, d)),      # teacher chunk c+2
            pl.BlockSpec((B, block_d), lambda c, d: (1 - c, d)),      # student chunk 1-c
            pl.BlockSpec((1, block_d), lambda c, d: (0, d)),          # center
        ],
        out_specs=(
            pl.BlockSpec((B, 1), lambda c, d: (c, 0)),                # per-row losses
            pl.BlockSpec((1, 1, block_d), lambda c, d: (c, 0, d)),    # teacher col-sums
        ),
        out_shape=(
            jax.ShapeDtypeStruct((2 * B, 1), jnp.float32),
            jax.ShapeDtypeStruct((2, 1, D), jnp.float32),
        ),
        scratch_shapes=[pltpu.VMEM((B, 1), jnp.float32)] * 5,         # mt, zt, w, ms, zs
        compiler_params=pltpu.CompilerParams(
            dimension_semantics=("parallel", "arbitrary")),
    )(scales, teacher_output, teacher_output, student_output, center)

    # tiny wrapper-side combines (keeps the chunk-pair axis fully parallel)
    loss = jnp.sum(rowloss) / (2.0 * B)
    # TODO(synk): torch.distributed.all_reduce omitted -- single-device (world_size=1).
    batch_center = jnp.sum(colsum, axis=(0, 1))[None, :] / Nt
    new_center = (center.astype(jnp.float32) * center_momentum
                  + batch_center * (1.0 - center_momentum))
    return loss, new_center


# ---------------------------------------------------------------------------
# Module-equivalent wrapper (holds center buffer and teacher-temp schedule).
# ---------------------------------------------------------------------------
class DINOLoss_Overlap:
    def __init__(self, out_dim, ncrops, warmup_teacher_temp, teacher_temp,
                 warmup_teacher_temp_epochs, nepochs,
                 student_temp=0.1, center_momentum=0.9, block_d=None):
        self.student_temp = student_temp
        self.center_momentum = center_momentum
        self.ncrops = ncrops
        self.block_d = block_d
        self.center = jnp.zeros((1, out_dim), jnp.float32)   # register_buffer init
        self.teacher_temp_schedule = np.concatenate((
            np.linspace(warmup_teacher_temp, teacher_temp, warmup_teacher_temp_epochs),
            np.ones(nepochs - warmup_teacher_temp_epochs) * teacher_temp))
        # TODO(synk): self.contrastive_loss = InfoNCE(...) is constructed in the torch
        # module but never used in forward() and InfoNCE is not defined in the spec.

    def __call__(self, student_output, teacher_output, epoch):
        temp = float(self.teacher_temp_schedule[epoch])
        loss, new_center = dino_loss_overlap_pallas(
            student_output, teacher_output, self.center,
            temp, self.student_temp, self.center_momentum, block_d=self.block_d)
        self.center = new_center
        return loss


# ---------------------------------------------------------------------------
# Pure-JAX reference for verification.
# ---------------------------------------------------------------------------
def dino_loss_overlap_ref(student_output, teacher_output, center, t_temp, s_temp):
    s = student_output / s_temp
    s_chunks = jnp.split(s, 4, axis=0)
    t = jax.nn.softmax((teacher_output - center) / t_temp, axis=-1)
    t_chunks = jnp.split(t, 4, axis=0)
    loss1 = jnp.sum(-t_chunks[1] * jax.nn.log_softmax(s_chunks[0], axis=-1),
                    axis=-1).mean()
    loss2 = jnp.sum(-t_chunks[0] * jax.nn.log_softmax(s_chunks[1], axis=-1),
                    axis=-1).mean()
    return (loss1 + loss2) / 2.0


if __name__ == "__main__":
    B, out_dim = 8, 256            # chunk size 8 -> 32 rows; D = 2 x 128 lanes
    ncrops = 4
    nepochs, warmup_epochs = 10, 5
    warmup_teacher_temp, teacher_temp = 0.04, 0.07
    epoch = 2

    key = jax.random.PRNGKey(0)
    k1, k2 = jax.random.split(key)
    student_output = jax.random.normal(k1, (4 * B, out_dim), jnp.float32)
    teacher_output = jax.random.normal(k2, (4 * B, out_dim), jnp.float32)

    # Check both the streaming-D path (block_d=128 -> nd=2) and the
    # single-tile path (block_d=None -> nd=1, adaptive choice).
    for bd in (128, None):
        loss_mod = DINOLoss_Overlap(out_dim, ncrops, warmup_teacher_temp,
                                    teacher_temp, warmup_epochs, nepochs,
                                    block_d=bd)
        old_center = loss_mod.center

        loss = loss_mod(student_output, teacher_output, epoch)
        loss = jax.block_until_ready(loss)
        new_center = jax.block_until_ready(loss_mod.center)

        t_temp = float(loss_mod.teacher_temp_schedule[epoch])
        ref_loss = dino_loss_overlap_ref(student_output, teacher_output,
                                         old_center, t_temp,
                                         loss_mod.student_temp)
        ref_center = (old_center * loss_mod.center_momentum
                      + jnp.mean(teacher_output, axis=0, keepdims=True)
                      * (1.0 - loss_mod.center_momentum))
        assert np.allclose(np.asarray(loss), np.asarray(ref_loss),
                           rtol=1e-4, atol=1e-4)
        assert np.allclose(np.asarray(new_center), np.asarray(ref_center),
                           rtol=1e-4, atol=1e-4)

    print("KERNEL_OK")
</pallas_src>

<mosaic_0001>
module attributes {stable_mosaic.version = 11 : i64} {
  func.func @_dino_overlap_kernel(%arg0: i32, %arg1: i32, %arg2: memref<2xf32, #tpu.memory_space<smem>>, %arg3: memref<8x128xf32, #tpu.memory_space<vmem>>, %arg4: memref<8x128xf32, #tpu.memory_space<vmem>>, %arg5: memref<8x128xf32, #tpu.memory_space<vmem>>, %arg6: memref<1x128xf32, #tpu.memory_space<vmem>>, %arg7: memref<8x1xf32, #tpu.memory_space<vmem>>, %arg8: memref<1x1x128xf32, #tpu.memory_space<vmem>>, %arg9: memref<8x1xf32, #tpu.memory_space<vmem>>, %arg10: memref<8x1xf32, #tpu.memory_space<vmem>>, %arg11: memref<8x1xf32, #tpu.memory_space<vmem>>, %arg12: memref<8x1xf32, #tpu.memory_space<vmem>>, %arg13: memref<8x1xf32, #tpu.memory_space<vmem>>) attributes {dimension_semantics = [#tpu.dimension_semantics<parallel>, #tpu.dimension_semantics<arbitrary>], iteration_bounds = array<i64: 2, 2>, scalar_prefetch = 0 : i64, scratch_operands = 5 : i64, tpu.core_type = #tpu.core_type<tc>, window_params = [{transform_indices = @transform_0, window_bounds = array<i64: 2>}, {transform_indices = @transform_1, window_bounds = array<i64: 8, 128>}, {transform_indices = @transform_2, window_bounds = array<i64: 8, 128>}, {transform_indices = @transform_3, window_bounds = array<i64: 8, 128>}, {transform_indices = @transform_4, window_bounds = array<i64: 1, 128>}, {transform_indices = @transform_5, window_bounds = array<i64: 8, 1>}, {transform_indices = @transform_6, window_bounds = array<i64: 1, 1, 128>}]} {
    %c0 = arith.constant 0 : index
    %0 = memref.load %arg2[%c0] : memref<2xf32, #tpu.memory_space<smem>>
    %c1 = arith.constant 1 : index
    %1 = memref.load %arg2[%c1] : memref<2xf32, #tpu.memory_space<smem>>
    %c0_0 = arith.constant 0 : index
    %c0_1 = arith.constant 0 : index
    %2 = vector.load %arg3[%c0_0, %c0_1] : memref<8x128xf32, #tpu.memory_space<vmem>>, vector<8x128xf32>
    %c0_2 = arith.constant 0 : index
    %c0_3 = arith.constant 0 : index
    %3 = vector.load %arg4[%c0_2, %c0_3] : memref<8x128xf32, #tpu.memory_space<vmem>>, vector<8x128xf32>
    %c0_4 = arith.constant 0 : index
    %c0_5 = arith.constant 0 : index
    %4 = vector.load %arg5[%c0_4, %c0_5] : memref<8x128xf32, #tpu.memory_space<vmem>>, vector<8x128xf32>
    %c0_6 = arith.constant 0 : index
    %c0_7 = arith.constant 0 : index
    %5 = vector.load %arg6[%c0_6, %c0_7] : memref<1x128xf32, #tpu.memory_space<vmem>>, vector<1x128xf32>
    %cst = arith.constant dense<0.000000e+00> : vector<128xf32>
    %6 = vector.multi_reduction <add>, %2, %cst [0] : vector<8x128xf32> to vector<128xf32>
    %7 = vector.shape_cast %6 : vector<128xf32> to vector<1x128xf32>
    %cst_8 = arith.constant dense<0.000000e+00> : vector<128xf32>
    %8 = vector.multi_reduction <add>, %3, %cst_8 [0] : vector<8x128xf32> to vector<128xf32>
    %9 = vector.shape_cast %8 : vector<128xf32> to vector<1x128xf32>
    %10 = arith.addf %7, %9 : vector<1x128xf32>
    %c0_9 = arith.constant 0 : index
    %c0_10 = arith.constant 0 : index
    %c0_11 = arith.constant 0 : index
    %11 = vector.load %arg8[%c0_9, %c0_10, %c0_11] : memref<1x1x128xf32, #tpu.memory_space<vmem>>, vector<1x1x128xf32>
    %12 = vector.shape_cast %11 : vector<1x1x128xf32> to vector<1x128xf32>
    %13 = vector.shape_cast %10 : vector<1x128xf32> to vector<1x1x128xf32>
    tpu.vector_store %arg8[%c0_9, %c0_10, %c0_11], %13 {strides = array<i32>} : memref<1x1x128xf32, #tpu.memory_space<vmem>>, vector<1x1x128xf32>,
    %c0_i32 = arith.constant 0 : i32
    %14 = arith.cmpi eq, %arg1, %c0_i32 : i32
    %15 = arith.extui %14 : i1 to i32
    %c0_i32_12 = arith.constant 0 : i32
    %16 = arith.cmpi ne, %15, %c0_i32_12 : i32
    scf.if %16 {
      %cst_43 = arith.constant 0xFF800000 : f32
      %67 = vector.broadcast %cst_43 : f32 to vector<8x1xf32>
      %c0_44 = arith.constant 0 : index
      %c0_45 = arith.constant 0 : index
      %68 = vector.load %arg9[%c0_44, %c0_45] : memref<8x1xf32, #tpu.memory_space<vmem>>, vector<8x1xf32>
      tpu.vector_store %arg9[%c0_44, %c0_45], %67 {strides = array<i32>} : memref<8x1xf32, #tpu.memory_space<vmem>>, vector<8x1xf32>,
      %cst_46 = arith.constant 0.000000e+00 : f32
      %69 = vector.broadcast %cst_46 : f32 to vector<8x1xf32>
      %c0_47 = arith.constant 0 : index
      %c0_48 = arith.constant 0 : index
      %70 = vector.load %arg10[%c0_47, %c0_48] : memref<8x1xf32, #tpu.memory_space<vmem>>, vector<8x1xf32>
      tpu.vector_store %arg10[%c0_47, %c0_48], %69 {strides = array<i32>} : memref<8x1xf32, #tpu.memory_space<vmem>>, vector<8x1xf32>,
      %cst_49 = arith.constant 0.000000e+00 : f32
      %71 = vector.broadcast %cst_49 : f32 to vector<8x1xf32>
      %c0_50 = arith.constant 0 : index
      %c0_51 = arith.constant 0 : index
      %72 = vector.load %arg11[%c0_50, %c0_51] : memref<8x1xf32, #tpu.memory_space<vmem>>, vector<8x1xf32>
      tpu.vector_store %arg11[%c0_50, %c0_51], %71 {strides = array<i32>} : memref<8x1xf32, #tpu.memory_space<vmem>>, vector<8x1xf32>,
      %cst_52 = arith.constant 0xFF800000 : f32
      %73 = vector.broadcast %cst_52 : f32 to vector<8x1xf32>
      %c0_53 = arith.constant 0 : index
      %c0_54 = arith.constant 0 : index
      %74 = vector.load %arg12[%c0_53, %c0_54] : memref<8x1xf32, #tpu.memory_space<vmem>>, vector<8x1xf32>
      tpu.vector_store %arg12[%c0_53, %c0_54], %73 {strides = array<i32>} : memref<8x1xf32, #tpu.memory_space<vmem>>, vector<8x1xf32>,
      %cst_55 = arith.constant 0.000000e+00 : f32
      %75 = vector.broadcast %cst_55 : f32 to vector<8x1xf32>
      %c0_56 = arith.constant 0 : index
      %c0_57 = arith.constant 0 : index
      %76 = vector.load %arg13[%c0_56, %c0_57] : memref<8x1xf32, #tpu.memory_space<vmem>>, vector<8x1xf32>
      tpu.vector_store %arg13[%c0_56, %c0_57], %75 {strides = array<i32>} : memref<8x1xf32, #tpu.memory_space<vmem>>, vector<8x1xf32>,
    } else {
    }
    %17 = vector.broadcast %5 : vector<1x128xf32> to vector<8x128xf32>
    %18 = arith.subf %2, %17 : vector<8x128xf32>
    %19 = vector.broadcast %0 : f32 to vector<8x128xf32>
    %20 = arith.mulf %18, %19 : vector<8x128xf32>
    %21 = vector.broadcast %1 : f32 to vector<8x128xf32>
    %22 = arith.mulf %4, %21 : vector<8x128xf32>
    %c0_13 = arith.constant 0 : index
    %c0_14 = arith.constant 0 : index
    %23 = vector.load %arg9[%c0_13, %c0_14] : memref<8x1xf32, #tpu.memory_space<vmem>>, vector<8x1xf32>
    %cst_15 = arith.constant dense<0xFF800000> : vector<8xf32>
    %24 = vector.multi_reduction <maximumf>, %20, %cst_15 [1] : vector<8x128xf32> to vector<8xf32>
    %25 = vector.shape_cast %24 : vector<8xf32> to vector<8x1xf32>
    %26 = arith.maximumf %23, %25 : vector<8x1xf32>
    %c0_16 = arith.constant 0 : index
    %c0_17 = arith.constant 0 : index
    %27 = vector.load %arg9[%c0_16, %c0_17] : memref<8x1xf32, #tpu.memory_space<vmem>>, vector<8x1xf32>
    %28 = arith.subf %27, %26 : vector<8x1xf32>
    %29 = math.exp %28 : vector<8x1xf32>
    %30 = vector.broadcast %26 : vector<8x1xf32> to vector<8x128xf32>
    %31 = arith.subf %20, %30 : vector<8x128xf32>
    %32 = math.exp %31 : vector<8x128xf32>
    %c0_18 = arith.constant 0 : index
    %c0_19 = arith.constant 0 : index
    %33 = vector.load %arg10[%c0_18, %c0_19] : memref<8x1xf32, #tpu.memory_space<vmem>>, vector<8x1xf32>
    %34 = arith.mulf %29, %33 : vector<8x1xf32>
    %cst_20 = arith.constant dense<0.000000e+00> : vector<8xf32>
    %35 = vector.multi_reduction <add>, %32, %cst_20 [1] : vector<8x128xf32> to vector<8xf32>
    %36 = vector.shape_cast %35 : vector<8xf32> to vector<8x1xf32>
    %37 = arith.addf %34, %36 : vector<8x1xf32>
    %c0_21 = arith.constant 0 : index
    %c0_22 = arith.constant 0 : index
    %38 = vector.load %arg10[%c0_21, %c0_22] : memref<8x1xf32, #tpu.memory_space<vmem>>, vector<8x1xf32>
    tpu.vector_store %arg10[%c0_21, %c0_22], %37 {strides = array<i32>} : memref<8x1xf32, #tpu.memory_space<vmem>>, vector<8x1xf32>,
    %c0_23 = arith.constant 0 : index
    %c0_24 = arith.constant 0 : index
    %39 = vector.load %arg11[%c0_23, %c0_24] : memref<8x1xf32, #tpu.memory_space<vmem>>, vector<8x1xf32>
    %40 = arith.mulf %29, %39 : vector<8x1xf32>
    %41 = arith.mulf %32, %22 : vector<8x128xf32>
    %cst_25 = arith.constant dense<0.000000e+00> : vector<8xf32>
    %42 = vector.multi_reduction <add>, %41, %cst_25 [1] : vector<8x128xf32> to vector<8xf32>
    %43 = vector.shape_cast %42 : vector<8xf32> to vector<8x1xf32>
    %44 = arith.addf %40, %43 : vector<8x1xf32>
    %c0_26 = arith.constant 0 : index
    %c0_27 = arith.constant 0 : index
    %45 = vector.load %arg11[%c0_26, %c0_27] : memref<8x1xf32, #tpu.memory_space<vmem>>, vector<8x1xf32>
    tpu.vector_store %arg11[%c0_26, %c0_27], %44 {strides = array<i32>} : memref<8x1xf32, #tpu.memory_space<vmem>>, vector<8x1xf32>,
    %c0_28 = arith.constant 0 : index
    %c0_29 = arith.constant 0 : index
    %46 = vector.load %arg9[%c0_28, %c0_29] : memref<8x1xf32, #tpu.memory_space<vmem>>, vector<8x1xf32>
    tpu.vector_store %arg9[%c0_28, %c0_29], %26 {strides = array<i32>} : memref<8x1xf32, #tpu.memory_space<vmem>>, vector<8x1xf32>,
    %c0_30 = arith.constant 0 : index
    %c0_31 = arith.constant 0 : index
    %47 = vector.load %arg12[%c0_30, %c0_31] : memref<8x1xf32, #tpu.memory_space<vmem>>, vector<8x1xf32>
    %cst_32 = arith.constant dense<0xFF800000> : vector<8xf32>
    %48 = vector.multi_reduction <maximumf>, %22, %cst_32 [1] : vector<8x128xf32> to vector<8xf32>
    %49 = vector.shape_cast %48 : vector<8xf32> to vector<8x1xf32>
    %50 = arith.maximumf %47, %49 : vector<8x1xf32>
    %c0_33 = arith.constant 0 : index
    %c0_34 = arith.constant 0 : index
    %51 = vector.load %arg12[%c0_33, %c0_34] : memref<8x1xf32, #tpu.memory_space<vmem>>, vector<8x1xf32>
    %52 = arith.subf %51, %50 : vector<8x1xf32>
    %53 = math.exp %52 : vector<8x1xf32>
    %c0_35 = arith.constant 0 : index
    %c0_36 = arith.constant 0 : index
    %54 = vector.load %arg13[%c0_35, %c0_36] : memref<8x1xf32, #tpu.memory_space<vmem>>, vector<8x1xf32>
    %55 = arith.mulf %53, %54 : vector<8x1xf32>
    %56 = vector.broadcast %50 : vector<8x1xf32> to vector<8x128xf32>
    %57 = arith.subf %22, %56 : vector<8x128xf32>
    %58 = math.exp %57 : vector<8x128xf32>
    %cst_37 = arith.constant dense<0.000000e+00> : vector<8xf32>
    %59 = vector.multi_reduction <add>, %58, %cst_37 [1] : vector<8x128xf32> to vector<8xf32>
    %60 = vector.shape_cast %59 : vector<8xf32> to vector<8x1xf32>
    %61 = arith.addf %55, %60 : vector<8x1xf32>
    %c0_38 = arith.constant 0 : index
    %c0_39 = arith.constant 0 : index
    %62 = vector.load %arg13[%c0_38, %c0_39] : memref<8x1xf32, #tpu.memory_space<vmem>>, vector<8x1xf32>
    tpu.vector_store %arg13[%c0_38, %c0_39], %61 {strides = array<i32>} : memref<8x1xf32, #tpu.memory_space<vmem>>, vector<8x1xf32>,
    %c0_40 = arith.constant 0 : index
    %c0_41 = arith.constant 0 : index
    %63 = vector.load %arg12[%c0_40, %c0_41] : memref<8x1xf32, #tpu.memory_space<vmem>>, vector<8x1xf32>
    tpu.vector_store %arg12[%c0_40, %c0_41], %50 {strides = array<i32>} : memref<8x1xf32, #tpu.memory_space<vmem>>, vector<8x1xf32>,
    %c1_i32 = arith.constant 1 : i32
    %64 = arith.cmpi eq, %arg1, %c1_i32 : i32
    %65 = arith.extui %64 : i1 to i32
    %c0_i32_42 = arith.constant 0 : i32
    %66 = arith.cmpi ne, %65, %c0_i32_42 : i32
    scf.if %66 {
      %c0_43 = arith.constant 0 : index
      %c0_44 = arith.constant 0 : index
      %67 = vector.load %arg12[%c0_43, %c0_44] : memref<8x1xf32, #tpu.memory_space<vmem>>, vector<8x1xf32>
      %c0_45 = arith.constant 0 : index
      %c0_46 = arith.constant 0 : index
      %68 = vector.load %arg13[%c0_45, %c0_46] : memref<8x1xf32, #tpu.memory_space<vmem>>, vector<8x1xf32>
      %69 = math.log %68 : vector<8x1xf32>
      %70 = arith.addf %67, %69 : vector<8x1xf32>
      %c0_47 = arith.constant 0 : index
      %c0_48 = arith.constant 0 : index
      %71 = vector.load %arg11[%c0_47, %c0_48] : memref<8x1xf32, #tpu.memory_space<vmem>>, vector<8x1xf32>
      %c0_49 = arith.constant 0 : index
      %c0_50 = arith.constant 0 : index
      %72 = vector.load %arg10[%c0_49, %c0_50] : memref<8x1xf32, #tpu.memory_space<vmem>>, vector<8x1xf32>
      %73 = arith.divf %71, %72 : vector<8x1xf32>
      %74 = arith.subf %70, %73 : vector<8x1xf32>
      %c0_51 = arith.constant 0 : index
      %c0_52 = arith.constant 0 : index
      %75 = vector.load %arg7[%c0_51, %c0_52] : memref<8x1xf32, #tpu.memory_space<vmem>>, vector<8x1xf32>
      tpu.vector_store %arg7[%c0_51, %c0_52], %74 {strides = array<i32>} : memref<8x1xf32, #tpu.memory_space<vmem>>, vector<8x1xf32>,
    } else {
    }
    return
  }
  func.func @transform_0(%arg0: i32, %arg1: i32) -> i32 {
    %c0_i32 = arith.constant 0 : i32
    %c0_i32_0 = arith.constant 0 : i32
    return %c0_i32 : i32
  }
  func.func @transform_1(%arg0: i32, %arg1: i32) -> (i32, i32) {
    %c0_i32 = arith.constant 0 : i32
    return %arg0, %arg1 : i32, i32
  }
  func.func @transform_2(%arg0: i32, %arg1: i32) -> (i32, i32) {
    %c2_i32 = arith.constant 2 : i32
    %0 = arith.addi %arg0, %c2_i32 : i32
    %c0_i32 = arith.constant 0 : i32
    return %0, %arg1 : i32, i32
  }
  func.func @transform_3(%arg0: i32, %arg1: i32) -> (i32, i32) {
    %c1_i32 = arith.constant 1 : i32
    %0 = arith.subi %c1_i32, %arg0 : i32
    %c0_i32 = arith.constant 0 : i32
    return %0, %arg1 : i32, i32
  }
  func.func @transform_4(%arg0: i32, %arg1: i32) -> (i32, i32) {
    %c0_i32 = arith.constant 0 : i32
    %c0_i32_0 = arith.constant 0 : i32
    return %c0_i32, %arg1 : i32, i32
  }
  func.func @transform_5(%arg0: i32, %arg1: i32) -> (i32, i32) {
    %c0_i32 = arith.constant 0 : i32
    %c0_i32_0 = arith.constant 0 : i32
    return %arg0, %c0_i32 : i32, i32
  }
  func.func @transform_6(%arg0: i32, %arg1: i32) -> (i32, i32, i32) {
    %c0_i32 = arith.constant 0 : i32
    %c0_i32_0 = arith.constant 0 : i32
    return %arg0, %c0_i32, %arg1 : i32, i32, i32
  }
}

</mosaic_0001>

<llo_original>
// kernel: tpu_custom_call.1
$region0: #{tpu_custom_call.1}
  #allocation0 [shape = 'u32[]', space=smem, size = 0x4, offset = 0x4, fixed_abs, tag = 'smem constant byte address 0x4 - core index']
  #allocation1 [shape = 'u32[144,128]{1,0:T(1,128)}', space=vmem, size = 0x12000, scoped, tag = 'internal scratch']
  #allocation2 [shape = 'f32[8,1]{1,0:T(8,128)}', space=vmem, size = 0x1000, scoped, tag = 'scratch operand']
  #allocation3 [shape = 'f32[8,1]{1,0:T(8,128)}', space=vmem, size = 0x1000, scoped, tag = 'scratch operand']
  #allocation4 [shape = 'f32[8,1]{1,0:T(8,128)}', space=vmem, size = 0x1000, scoped, tag = 'scratch operand']
  #allocation5 [shape = 'f32[8,1]{1,0:T(8,128)}', space=vmem, size = 0x1000, scoped, tag = 'scratch operand']
  #allocation6 [shape = 'f32[8,1]{1,0:T(8,128)}', space=vmem, size = 0x1000, scoped, tag = 'scratch operand']
  %s0 = inlined_call_operand.hbm [shape: f32[2], index: 0, kind: input, shape index: {}]
  %s1 = inlined_call_operand.hbm [shape: f32[32,256], index: 1, kind: input, shape index: {}]
  %s2 = inlined_call_operand.hbm [shape: f32[32,256], index: 2, kind: input, shape index: {}]
  %s3 = inlined_call_operand.hbm [shape: f32[32,256], index: 3, kind: input, shape index: {}]
  %s4 = inlined_call_operand.vmem [shape: f32[1,256], index: 4, kind: input, shape index: {}]
  %s5 = inlined_call_operand.vmem [shape: f32[16,1], index: 5, kind: output, shape index: {0}]
  %s6 = inlined_call_operand.hbm [shape: f32[2,1,256], index: 6, kind: output, shape index: {1}]
  %7 = xla_tuple %s5, %s6
  %s8 = sld [smem:[#allocation0]]
  $region85: #{tpu_custom_call.1} parent=0
    _
  %s10 = ssub.s32 1, %s8
  %s11 = scalar_select 0, %s10, %s8
  $region1: #{tpu_custom_call.1} parent=0
    #allocation7 [shape = 'u8[512]{0}', space=smem, size = 0x200, scoped, tag = 'input window, operand 0, single buffered']
    #allocation8 [shape = 's32[2]{0}', space=sflag, size = 0x8, scoped, tag = 'scoped memory for tpu_custom_call.1']
    #allocation9 [shape = 's32[2]{0}', space=sflag, size = 0x8, scoped, tag = 'scoped memory for tpu_custom_call.1']
    #allocation10 [shape = 's32[2]{0}', space=sflag, size = 0x8, scoped, tag = 'scoped memory for tpu_custom_call.1']
    #allocation11 [shape = 'u8[8192]{0}', space=vmem, size = 0x2000, scoped, tag = 'input window, operand 1']
    #allocation12 [shape = 'u8[8192]{0}', space=vmem, size = 0x2000, scoped, tag = 'input window, operand 2']
    #allocation13 [shape = 's32[2]{0}', space=sflag, size = 0x8, scoped, tag = 'scoped memory for tpu_custom_call.1']
    #allocation14 [shape = 'u8[8192]{0}', space=vmem, size = 0x2000, scoped, tag = 'input window, operand 3']
    #allocation15 [shape = 'u8[1024]{0}', space=vmem, size = 0x400, scoped, tag = 'output window, operand 1']
    %12 = vsyncpa [#allocation10], 0
    %13 = vsyncpa [#allocation8], 0
    %s14 = scalar_lea.sflag [#allocation8], 1
    %15 = vsyncpa %s14, 0
    %16 = vsyncpa [#allocation13], 0
    %s17 = scalar_lea.sflag [#allocation13], 1
    %18 = vsyncpa %s17, 0
    %19 = vsyncpa [#allocation9], 0
    %s20 = scalar_lea.sflag [#allocation9], 1
    %21 = vsyncpa %s20, 0
    loop: start=0, step=1, limit=6
    $region2: #{tpu_custom_call.1} parent=1 // loop_pre_header
      _
    $region3: #{tpu_custom_call.1} parent=1 // loop_header
      %s23 = sphi 0, %s27
      %p24 = scmp.ge.s32.totalorder %s23, 6
      %s30 = sphi 0, %s42
      %s31 = sphi 0, %s38
      %s32 = sphi 0, %s30
      %s33 = sphi 0, %s31
      %s34 = sphi 0, %s32
      %s35 = sphi 0, %s33
      %s43 = sphi 0, %s43
      %s45 = sphi 0, %s43
      %s46 = sphi 0, %s45
      %s60 = sphi 0, %s46
      %s68 = sphi 0, %s70
      %s71 = sphi 0, %s68
      %s72 = sphi 0, %s71
      %s88 = sphi 0, %s72
      %s98 = sphi 0, %s100
      %s101 = sphi 0, %s98
      %s102 = sphi 0, %s101
      %s118 = sphi 0, %s102
      %s128 = sphi 0, %s130
      %s131 = sphi 0, %s128
      %s132 = sphi 0, %s131
      %s148 = sphi 0, %s132
      %s154 = sphi 0, %s156
      %s157 = sphi 0, %s154
      %s158 = sphi 0, %s157
      %s174 = sphi 0, %s158
      %s180 = sphi 0, %s182
      %s183 = sphi 0, %s180
      %s184 = sphi 0, %s183
      %s200 = sphi 0, %s184
      %s208 = sphi 0, %s210
      %s211 = sphi 0, %s208
      %s212 = sphi 0, %s211
      %s228 = sphi 0, %s212
    $region4: #{tpu_custom_call.1} parent=1 // loop_header_branch
      %26 = sbr.rel (%p24) target = $region8
    $region5: #{tpu_custom_call.1} parent=1 // loop_body
      %s28 = ssub.s32 %s23, 1
      %s29 = ssub.s32 %s23, 2
      %s36 = sadd.s32 1, %s31
      %p37 = scmp.ge.s32.totalorder %s36, 2
      %s38 = scalar_select %p37, 0, %s36
      %s39 = sadd.s32 1, %s30
      %s40 = scalar_select %p37, %s39, %s30
      %p41 = scmp.ge.s32.totalorder %s40, 2
      %s42 = scalar_select %p41, 0, %s40
      %s44 = sadd.s32 %s43, 1
      %p47 = scmp.eq.s32.totalorder %s23, 3
      %p48 = scmp.ne.s32.totalorder %s43, %s45
      %p49 = scmp.eq.s32.totalorder %s23, 0
      %p50 = por %p48, %p49
      %p51 = scmp.ne.s32.totalorder %s43, %s45
      %p52 = scmp.eq.s32.totalorder %s28, 3
      %p53 = por %p51, %p52
      %p54 = scmp.ne.s32.totalorder %s45, %s46
      %p55 = scmp.eq.s32.totalorder %s28, 0
      %p56 = por %p54, %p55
      %p57 = scmp.ne.s32.totalorder %s45, %s46
      %p58 = scmp.eq.s32.totalorder %s29, 3
      %p59 = por %p57, %p58
      %p61 = scmp.ne.s32.totalorder %s46, %s60
      %p62 = scmp.eq.s32.totalorder %s29, 0
      %p63 = por %p61, %p62
      %s64 = ssub.s32 %s30, %s42
      %s65 = ssub.s32 %s31, %s38
      %s66 = sor.u32 %s64, %s65
      %p67 = scmp.eq.s32.totalorder %s66, 0
      %s69 = sadd.s32 %s68, 1
      %s70 = scalar_select %p67, %s68, %s69
      %p73 = pneg %p67
      %p74 = scmp.eq.s32.totalorder %s23, 3
      %p75 = por %p73, %p74
      %p76 = scmp.ne.s32.totalorder %s68, %s71
      %p77 = scmp.eq.s32.totalorder %s23, 0
      %p78 = por %p76, %p77
      %p79 = scmp.ne.s32.totalorder %s68, %s71
      %p80 = scmp.eq.s32.totalorder %s28, 3
      %p81 = por %p79, %p80
      %p82 = scmp.ne.s32.totalorder %s71, %s72
      %p83 = scmp.eq.s32.totalorder %s28, 0
      %p84 = por %p82, %p83
      %p85 = scmp.ne.s32.totalorder %s71, %s72
      %p86 = scmp.eq.s32.totalorder %s29, 3
      %p87 = por %p85, %p86
      %p89 = scmp.ne.s32.totalorder %s72, %s88
      %p90 = scmp.eq.s32.totalorder %s29, 0
      %p91 = por %p89, %p90
      %s92 = sadd.s32 %s30, 2
      %s93 = sadd.s32 %s42, 2
      %s94 = ssub.s32 %s92, %s93
      %s95 = ssub.s32 %s31, %s38
      %s96 = sor.u32 %s94, %s95
      %p97 = scmp.eq.s32.totalorder %s96, 0
      %s99 = sadd.s32 %s98, 1
      %s100 = scalar_select %p97, %s98, %s99
      %p103 = pneg %p97
      %p104 = scmp.eq.s32.totalorder %s23, 3
      %p105 = por %p103, %p104
      %p106 = scmp.ne.s32.totalorder %s98, %s101
      %p107 = scmp.eq.s32.totalorder %s23, 0
      %p108 = por %p106, %p107
      %p109 = scmp.ne.s32.totalorder %s98, %s101
      %p110 = scmp.eq.s32.totalorder %s28, 3
      %p111 = por %p109, %p110
      %p112 = scmp.ne.s32.totalorder %s101, %s102
      %p113 = scmp.eq.s32.totalorder %s28, 0
      %p114 = por %p112, %p113
      %p115 = scmp.ne.s32.totalorder %s101, %s102
      %p116 = scmp.eq.s32.totalorder %s29, 3
      %p117 = por %p115, %p116
      %p119 = scmp.ne.s32.totalorder %s102, %s118
      %p120 = scmp.eq.s32.totalorder %s29, 0
      %p121 = por %p119, %p120
      %s122 = ssub.s32 1, %s30
      %s123 = ssub.s32 1, %s42
      %s124 = ssub.s32 %s122, %s123
      %s125 = ssub.s32 %s31, %s38
      %s126 = sor.u32 %s124, %s125
      %p127 = scmp.eq.s32.totalorder %s126, 0
      %s129 = sadd.s32 %s128, 1
      %s130 = scalar_select %p127, %s128, %s129
      %p133 = pneg %p127
      %p134 = scmp.eq.s32.totalorder %s23, 3
      %p135 = por %p133, %p134
      %p136 = scmp.ne.s32.totalorder %s128, %s131
      %p137 = scmp.eq.s32.totalorder %s23, 0
      %p138 = por %p136, %p137
      %p139 = scmp.ne.s32.totalorder %s128, %s131
      %p140 = scmp.eq.s32.totalorder %s28, 3
      %p141 = por %p139, %p140
      %p142 = scmp.ne.s32.totalorder %s131, %s132
      %p143 = scmp.eq.s32.totalorder %s28, 0
      %p144 = por %p142, %p143
      %p145 = scmp.ne.s32.totalorder %s131, %s132
      %p146 = scmp.eq.s32.totalorder %s29, 3
      %p147 = por %p145, %p146
      %p149 = scmp.ne.s32.totalorder %s132, %s148
      %p150 = scmp.eq.s32.totalorder %s29, 0
      %p151 = por %p149, %p150
      %s152 = ssub.s32 %s31, %s38
      %p153 = scmp.eq.s32.totalorder %s152, 0
      %s155 = sadd.s32 %s154, 1
      %s156 = scalar_select %p153, %s154, %s155
      %p159 = pneg %p153
      %p160 = scmp.eq.s32.totalorder %s23, 3
      %p161 = por %p159, %p160
      %p162 = scmp.ne.s32.totalorder %s154, %s157
      %p163 = scmp.eq.s32.totalorder %s23, 0
      %p164 = por %p162, %p163
      %p165 = scmp.ne.s32.totalorder %s154, %s157
      %p166 = scmp.eq.s32.totalorder %s28, 3
      %p167 = por %p165, %p166
      %p168 = scmp.ne.s32.totalorder %s157, %s158
      %p169 = scmp.eq.s32.totalorder %s28, 0
      %p170 = por %p168, %p169
      %p171 = scmp.ne.s32.totalorder %s157, %s158
      %p172 = scmp.eq.s32.totalorder %s29, 3
      %p173 = por %p171, %p172
      %p175 = scmp.ne.s32.totalorder %s158, %s174
      %p176 = scmp.eq.s32.totalorder %s29, 0
      %p177 = por %p175, %p176
      %s178 = ssub.s32 %s30, %s42
      %p179 = scmp.eq.s32.totalorder %s178, 0
      %s181 = sadd.s32 %s180, 1
      %s182 = scalar_select %p179, %s180, %s181
      %p185 = pneg %p179
      %p186 = scmp.eq.s32.totalorder %s23, 3
      %p187 = por %p185, %p186
      %p188 = scmp.ne.s32.totalorder %s180, %s183
      %p189 = scmp.eq.s32.totalorder %s23, 0
      %p190 = por %p188, %p189
      %p191 = scmp.ne.s32.totalorder %s180, %s183
      %p192 = scmp.eq.s32.totalorder %s28, 3
      %p193 = por %p191, %p192
      %p194 = scmp.ne.s32.totalorder %s183, %s184
      %p195 = scmp.eq.s32.totalorder %s28, 0
      %p196 = por %p194, %p195
      %p197 = scmp.ne.s32.totalorder %s183, %s184
      %p198 = scmp.eq.s32.totalorder %s29, 3
      %p199 = por %p197, %p198
      %p201 = scmp.ne.s32.totalorder %s184, %s200
      %p202 = scmp.eq.s32.totalorder %s29, 0
      %p203 = por %p201, %p202
      %s204 = ssub.s32 %s30, %s42
      %s205 = ssub.s32 %s31, %s38
      %s206 = sor.u32 %s204, %s205
      %p207 = scmp.eq.s32.totalorder %s206, 0
      %s209 = sadd.s32 %s208, 1
      %s210 = scalar_select %p207, %s208, %s209
      %p213 = pneg %p207
      %p214 = scmp.eq.s32.totalorder %s23, 3
      %p215 = por %p213, %p214
      %p216 = scmp.ne.s32.totalorder %s208, %s211
      %p217 = scmp.eq.s32.totalorder %s23, 0
      %p218 = por %p216, %p217
      %p219 = scmp.ne.s32.totalorder %s208, %s211
      %p220 = scmp.eq.s32.totalorder %s28, 3
      %p221 = por %p219, %p220
      %p222 = scmp.ne.s32.totalorder %s211, %s212
      %p223 = scmp.eq.s32.totalorder %s28, 0
      %p224 = por %p222, %p223
      %p225 = scmp.ne.s32.totalorder %s211, %s212
      %p226 = scmp.eq.s32.totalorder %s29, 3
      %p227 = por %p225, %p226
      %p229 = scmp.ne.s32.totalorder %s212, %s228
      %p230 = scmp.eq.s32.totalorder %s29, 0
      %p231 = por %p229, %p230
      %p232 = scmp.le.s32.totalorder 1, %s23
      %p233 = scmp.lt.s32.totalorder %s23, 5
      %p234 = pnand %p232, %p233
      %p235 = pneg %p234
      // Predicated region
      $region9: #{tpu_custom_call.1} parent=5 // pred_check
        _
      $region10: #{tpu_custom_call.1} parent=5 // pred_check_branch
        %237 = sbr.rel (%p234) target = $region12
      $region11: #{tpu_custom_call.1} parent=5 // pred_region
        %s238 = ssub.s32 %s23, 1
        // Predicated region
        $region13: #{tpu_custom_call.1} parent=11 // pred_check
          %p239 = pneg %p56
        $region14: #{tpu_custom_call.1} parent=11 // pred_check_branch
          %241 = sbr.rel (%p239) target = $region16
        $region15: #{tpu_custom_call.1} parent=11 // pred_region
          %s243 = ssub.s32 16, 16
          %244 = vsyncadd [#allocation10], %s243
          %247 = dma.hbm_to_smem %s0, 16, [#allocation7], [#allocation10]
        $region16: #{tpu_custom_call.1} parent=11 // pred_fallthru
          _
      $region12: #{tpu_custom_call.1} parent=5 // pred_fallthru
        _
      %p248 = scmp.lt.s32.totalorder %s23, 4
      // Predicated region
      $region17: #{tpu_custom_call.1} parent=5 // pred_check
        %p249 = pneg %p248
      $region18: #{tpu_custom_call.1} parent=5 // pred_check_branch
        %251 = sbr.rel (%p249) target = $region20
      $region19: #{tpu_custom_call.1} parent=5 // pred_region
        // Predicated region
        $region21: #{tpu_custom_call.1} parent=19 // pred_check
          %p252 = pneg %p78
        $region22: #{tpu_custom_call.1} parent=19 // pred_check_branch
          %254 = sbr.rel (%p252) target = $region24
        $region23: #{tpu_custom_call.1} parent=19 // pred_region
          %s255 = sand.u32 %s68, 1
          %s256 = scalar_lea.sflag [#allocation8], %s255
          %s257 = sand.u32 %s68, 1
          %s258 = smul.addr %s257, 8
          %s259 = scalar_lea.vmem [#allocation11], %s258
          %s261 = ssub.s32 128, 128
          %262 = vsyncadd %s256, %s261
          %s263 = smul.addr %s30, 2
          %s264 = sadd.s32 %s31, %s263
          %s265 = smul.addr %s264, 128
          %s266 = scalar_lea.hbm %s1, %s265
          %s268 = sshll.u32 %s259, 4
          %s269 = int_to_ptr.vmem [resolvable:$true] %s268
          %271 = dma.hbm_to_vmem [thread:$0]  %s266, 128, %s269, %s256
        $region24: #{tpu_custom_call.1} parent=19 // pred_fallthru
          _
        // Predicated region
        $region25: #{tpu_custom_call.1} parent=19 // pred_check
          %p272 = pneg %p108
        $region26: #{tpu_custom_call.1} parent=19 // pred_check_branch
          %274 = sbr.rel (%p272) target = $region28
        $region27: #{tpu_custom_call.1} parent=19 // pred_region
          %s275 = sand.u32 %s23, 1
          %s276 = scalar_lea.sflag [#allocation13], %s275
          %s277 = sand.u32 %s98, 1
          %s278 = smul.addr %s277, 8
          %s279 = scalar_lea.vmem [#allocation12], %s278
          %s280 = sadd.s32 %s30, 2
          %s282 = ssub.s32 128, 128
          %283 = vsyncadd %s276, %s282
          %s284 = smul.addr %s280, 2
          %s285 = sadd.s32 %s31, %s284
          %s286 = smul.addr %s285, 128
          %s287 = scalar_lea.hbm %s2, %s286
          %s289 = sshll.u32 %s279, 4
          %s290 = int_to_ptr.vmem [resolvable:$true] %s289
          %292 = dma.hbm_to_vmem [thread:$0]  %s287, 128, %s290, %s276
        $region28: #{tpu_custom_call.1} parent=19 // pred_fallthru
          _
        // Predicated region
        $region29: #{tpu_custom_call.1} parent=19 // pred_check
          %p293 = pneg %p138
        $region30: #{tpu_custom_call.1} parent=19 // pred_check_branch
          %295 = sbr.rel (%p293) target = $region32
        $region31: #{tpu_custom_call.1} parent=19 // pred_region
          %s296 = sand.u32 %s23, 1
          %s297 = scalar_lea.sflag [#allocation13], %s296
          %s298 = sand.u32 %s128, 1
          %s299 = smul.addr %s298, 8
          %s300 = scalar_lea.vmem [#allocation14], %s299
          %s301 = ssub.s32 1, %s30
          %s303 = ssub.s32 128, 128
          %304 = vsyncadd %s297, %s303
          %s305 = smul.addr %s301, 2
          %s306 = sadd.s32 %s31, %s305
          %s307 = smul.addr %s306, 128
          %s308 = scalar_lea.hbm %s3, %s307
          %s310 = sshll.u32 %s300, 4
          %s311 = int_to_ptr.vmem [resolvable:$true] %s310
          %313 = dma.hbm_to_vmem [thread:$0]  %s308, 128, %s311, %s297
        $region32: #{tpu_custom_call.1} parent=19 // pred_fallthru
          _
        // Predicated region
        $region33: #{tpu_custom_call.1} parent=19 // pred_check
          %p314 = pneg %p164
        $region34: #{tpu_custom_call.1} parent=19 // pred_check_branch
          %316 = sbr.rel (%p314) target = $region36
        $region35: #{tpu_custom_call.1} parent=19 // pred_region
          %p317 = scmp.lt.s32.totalorder %s31, 1
          %s318 = scalar_select %p317, %s31, 1
          %s319 = scalar_lea.vmem %s4, %s318
        $region36: #{tpu_custom_call.1} parent=19 // pred_fallthru
          _
      $region20: #{tpu_custom_call.1} parent=5 // pred_fallthru
        _
      %p320 = scmp.le.s32.totalorder 1, %s23
      %p321 = scmp.lt.s32.totalorder %s23, 5
      %p322 = pnand %p320, %p321
      %p323 = pneg %p322
      // Predicated region
      $region37: #{tpu_custom_call.1} parent=5 // pred_check
        _
      $region38: #{tpu_custom_call.1} parent=5 // pred_check_branch
        %325 = sbr.rel (%p322) target = $region40
      $region39: #{tpu_custom_call.1} parent=5 // pred_region
        %s326 = ssub.s32 %s23, 1
        // Predicated region
        $region41: #{tpu_custom_call.1} parent=39 // pred_check
          %p327 = pneg %p56
        $region42: #{tpu_custom_call.1} parent=39 // pred_check_branch
          %329 = sbr.rel (%p327) target = $region44
        $region43: #{tpu_custom_call.1} parent=39 // pred_region
          %330 = dma.done [#allocation10], 16
        $region44: #{tpu_custom_call.1} parent=39 // pred_fallthru
          _
        %s331 = sand.u32 %s71, 1
        %s332 = scalar_lea.sflag [#allocation8], %s331
        %s333 = sand.u32 %s71, 1
        %s334 = smul.addr %s333, 8
        %s335 = scalar_lea.vmem [#allocation11], %s334
        // Predicated region
        $region45: #{tpu_custom_call.1} parent=39 // pred_check
          %p336 = pneg %p84
        $region46: #{tpu_custom_call.1} parent=39 // pred_check_branch
          %338 = sbr.rel (%p336) target = $region48
        $region47: #{tpu_custom_call.1} parent=39 // pred_region
          %339 = dma.done %s332, 128
        $region48: #{tpu_custom_call.1} parent=39 // pred_fallthru
          _
        %s340 = sand.u32 %s28, 1
        %s341 = scalar_lea.sflag [#allocation13], %s340
        %s342 = sand.u32 %s101, 1
        %s343 = smul.addr %s342, 8
        %s344 = scalar_lea.vmem [#allocation12], %s343
        // Predicated region
        $region49: #{tpu_custom_call.1} parent=39 // pred_check
          %p345 = pneg %p114
        $region50: #{tpu_custom_call.1} parent=39 // pred_check_branch
          %347 = sbr.rel (%p345) target = $region52
        $region51: #{tpu_custom_call.1} parent=39 // pred_region
          %348 = dma.done %s341, 128
        $region52: #{tpu_custom_call.1} parent=39 // pred_fallthru
          _
        %s349 = sand.u32 %s28, 1
        %s350 = scalar_lea.sflag [#allocation13], %s349
        %s351 = sand.u32 %s131, 1
        %s352 = smul.addr %s351, 8
        %s353 = scalar_lea.vmem [#allocation14], %s352
        // Predicated region
        $region53: #{tpu_custom_call.1} parent=39 // pred_check
          %p354 = pneg %p144
        $region54: #{tpu_custom_call.1} parent=39 // pred_check_branch
          %356 = sbr.rel (%p354) target = $region56
        $region55: #{tpu_custom_call.1} parent=39 // pred_region
          %357 = dma.done %s350, 128
        $region56: #{tpu_custom_call.1} parent=39 // pred_fallthru
          _
        %358 = sfence
        %p359 = pneg %p56
        %p360 = pneg %p53
        %s361 = sand.u32 %s71, 1
        %s362 = scalar_lea.sflag [#allocation8], %s361
        %s363 = sand.u32 %s71, 1
        %s364 = smul.addr %s363, 8
        %s365 = scalar_lea.vmem [#allocation11], %s364
        %p366 = pneg %p84
        %p367 = pneg %p81
        %s368 = sand.u32 %s28, 1
        %s369 = scalar_lea.sflag [#allocation13], %s368
        %s370 = sand.u32 %s101, 1
        %s371 = smul.addr %s370, 8
        %s372 = scalar_lea.vmem [#allocation12], %s371
        %p373 = pneg %p114
        %p374 = pneg %p111
        %s375 = sand.u32 %s28, 1
        %s376 = scalar_lea.sflag [#allocation13], %s375
        %s377 = sand.u32 %s131, 1
        %s378 = smul.addr %s377, 8
        %s379 = scalar_lea.vmem [#allocation14], %s378
        %p380 = pneg %p144
        %p381 = pneg %p141
        %p382 = scmp.lt.s32.totalorder %s33, 1
        %s383 = scalar_select %p382, %s33, 1
        %s384 = scalar_lea.vmem %s4, %s383
        %p385 = pneg %p170
        %p386 = pneg %p167
        %p387 = pneg %p196
        %p388 = pneg %p193
        %p389 = scmp.lt.s32.totalorder %s32, 1
        %s390 = scalar_select %p389, %s32, 1
        %s391 = smul.addr %s390, 8
        %s392 = scalar_lea.vmem %s5, %s391
        %p393 = pneg %p224
        %p394 = pneg %p221
        %s395 = sand.u32 %s211, 1
        %s396 = scalar_lea.sflag [#allocation9], %s395
        %s397 = sand.u32 %s211, 1
        %s398 = scalar_lea.vmem [#allocation15], %s397
        %s399 = sadd.s32 %s32, 2
        %s400 = ssub.s32 1, %s32
        %p401 = scmp.lt.s32.totalorder %s33, 1
        %s402 = scalar_select %p401, %s33, 1
        %s403 = scalar_lea.vmem %s4, %s402
        %p404 = scmp.lt.s32.totalorder %s32, 1
        %s405 = scalar_select %p404, %s32, 1
        %s406 = smul.addr %s405, 8
        %s407 = scalar_lea.vmem %s5, %s406
        %s408 = sld [smem:[#allocation7]]
        %s409 = sld [smem:[#allocation7 + $0x1]]
        %v410 = vld [vmem:[%s335] sm:$0xff]
        %v411 = vld [vmem:[%s344] sm:$0xff]
        %v412 = vld [vmem:[%s353] sm:$0xff]
        %v413 = vld [vmem:[%s403] sm:$0x1]
        %v414 = vrot.slane %v410, 4
        %v415 = vadd.f32 %v410, %v414
        %v416 = vrot.slane %v415, 2
        %v417 = vadd.f32 %v415, %v416
        %v418 = vrot.slane %v417, 1
        %v419 = vadd.f32 %v417, %v418
        %v420 = vrot.slane %v411, 4
        %v421 = vadd.f32 %v411, %v420
        %v422 = vrot.slane %v421, 2
        %v423 = vadd.f32 %v421, %v422
        %v424 = vrot.slane %v423, 1
        %v425 = vadd.f32 %v423, %v424
        %v426 = vadd.f32 %v419, %v425
        %427 = vst [vmem:[%s398] sm:$0x1] %v426
        %p428 = scmp.eq.s32.totalorder %s33, 0
        // Predicated region
        $region57: #{tpu_custom_call.1} parent=39 // pred_check
          %p429 = pneg %p428
        $region58: #{tpu_custom_call.1} parent=39 // pred_check_branch
          %431 = sbr.rel (%p429) target = $region60
        $region59: #{tpu_custom_call.1} parent=39 // pred_region
          %vm432 = vcmask 7168
          %433 = vst.msk [vmem:[#allocation2] sm:$0xff] %vm432, -inf
          %434 = vst.msk [vmem:[#allocation3] sm:$0xff] %vm432, 0.0
          %435 = vst.msk [vmem:[#allocation4] sm:$0xff] %vm432, 0.0
          %436 = vst.msk [vmem:[#allocation5] sm:$0xff] %vm432, -inf
          %437 = vst.msk [vmem:[#allocation6] sm:$0xff] %vm432, 0.0
        $region60: #{tpu_custom_call.1} parent=39 // pred_fallthru
          _
        %v439 = vlaneseq
        %v440 = vshrl.u32 %v439, 7
        %v441 = vsub.s32 0, %v440
        %v442 = vrot.slane %v413, %v441
        %v444 = vsub.f32 %v410, %v442
        %v445 = vstv %s408
        %v446 = vmul.f32 %v444, %v445
        %v447 = vstv %s409
        %v448 = vmul.f32 %v412, %v447
        %v449 = vld [vmem:[#allocation2] sm:$0xff]
        %450 = vmax.xlane.f32.xlu0 %v446
        %v451 = vpop.xlane.xlu0 %450
        %v452 = vmax.f32 %v449, %v451
        %v453 = vsub.f32 %v449, %v452
        %v454 = vmul.f32 %v453, 1.442695
        %v455 = vpow.pop %v454
        %457 = vset.pattern.permute.xlu0 0
        %458 = vperm.xlu0 %457, %v452
        %v459 = vpop.permute.xlu0 %458
        %v461 = vsub.f32 %v446, %v459
        %v462 = vmul.f32 %v461, 1.442695
        %v463 = vpow.pop %v462
        %v464 = vld [vmem:[#allocation3] sm:$0xff]
        %v465 = vmul.f32 %v455, %v464
        %466 = vadd.xlane.f32.xlu0 %v463
        %v467 = vpop.xlane.xlu0 %466
        %v468 = vadd.f32 %v465, %v467
        %vm469 = vcmask 7168
        %470 = vst.msk [vmem:[#allocation3] sm:$0xff] %vm469, %v468
        %v471 = vld [vmem:[#allocation4] sm:$0xff]
        %v472 = vmul.f32 %v455, %v471
        %v473 = vmul.f32 %v463, %v448
        %474 = vadd.xlane.f32.xlu0 %v473
        %v475 = vpop.xlane.xlu0 %474
        %v476 = vadd.f32 %v472, %v475
        %477 = vst.msk [vmem:[#allocation4] sm:$0xff] %vm469, %v476
        %478 = vst.msk [vmem:[#allocation2] sm:$0xff] %vm469, %v452
        %v479 = vld [vmem:[#allocation5] sm:$0xff]
        %480 = vmax.xlane.f32.xlu0 %v448
        %v481 = vpop.xlane.xlu0 %480
        %v482 = vmax.f32 %v479, %v481
        %v483 = vsub.f32 %v479, %v482
        %v484 = vmul.f32 %v483, 1.442695
        %v485 = vpow.pop %v484
        %v486 = vld [vmem:[#allocation6] sm:$0xff]
        %v487 = vmul.f32 %v485, %v486
        %489 = vset.pattern.permute.xlu0 0
        %490 = vperm.xlu0 %489, %v482
        %v491 = vpop.permute.xlu0 %490
        %v493 = vsub.f32 %v448, %v491
        %v494 = vmul.f32 %v493, 1.442695
        %v495 = vpow.pop %v494
        %496 = vadd.xlane.f32.xlu0 %v495
        %v497 = vpop.xlane.xlu0 %496
        %v498 = vadd.f32 %v487, %v497
        %499 = vst.msk [vmem:[#allocation6] sm:$0xff] %vm469, %v498
        %500 = vst.msk [vmem:[#allocation5] sm:$0xff] %vm469, %v482
        %p501 = scmp.eq.s32.totalorder %s33, 1
        // Predicated region
        $region61: #{tpu_custom_call.1} parent=39 // pred_check
          %p502 = pneg %p501
        $region62: #{tpu_custom_call.1} parent=39 // pred_check_branch
          %504 = sbr.rel (%p502) target = $region64
        $region63: #{tpu_custom_call.1} parent=39 // pred_region
          %v505 = vld [vmem:[#allocation5] sm:$0xff]
          %v506 = vld [vmem:[#allocation6] sm:$0xff]
          %v507 = vlog2.pop %v506
          %v508 = vmul.f32 %v507, 0.6931472
          %v509 = vadd.f32 %v505, %v508
          %v510 = vld [vmem:[#allocation4] sm:$0xff]
          %v511 = vld [vmem:[#allocation3] sm:$0xff]
          %v512 = vrcp.pop %v511
          %v513 = vmul.f32 %v510, %v512
          %v514 = vsub.f32 %v509, %v513
          %515 = vst.msk [vmem:[%s407] sm:$0xff] %vm469, %v514
        $region64: #{tpu_custom_call.1} parent=39 // pred_fallthru
          _
        %p516 = scmp.lt.s32.totalorder %s32, 1
        %s517 = scalar_select %p516, %s32, 1
        %s518 = smul.addr %s517, 8
        %s519 = scalar_lea.vmem %s5, %s518
        %s520 = sand.u32 %s211, 1
        %s521 = scalar_lea.sflag [#allocation9], %s520
        %s522 = sand.u32 %s211, 1
        %s523 = scalar_lea.vmem [#allocation15], %s522
        // Predicated region
        $region65: #{tpu_custom_call.1} parent=39 // pred_check
          %p524 = pneg %p193
        $region66: #{tpu_custom_call.1} parent=39 // pred_check_branch
          %526 = sbr.rel (%p524) target = $region68
        $region67: #{tpu_custom_call.1} parent=39 // pred_region
          _
        $region68: #{tpu_custom_call.1} parent=39 // pred_fallthru
          _
        // Predicated region
        $region69: #{tpu_custom_call.1} parent=39 // pred_check
          %p527 = pneg %p221
        $region70: #{tpu_custom_call.1} parent=39 // pred_check_branch
          %529 = sbr.rel (%p527) target = $region72
        $region71: #{tpu_custom_call.1} parent=39 // pred_region
          %s531 = ssub.s32 16, 16
          %532 = vsyncadd %s521, %s531
          %s533 = smul.addr %s32, 2
          %s534 = sadd.s32 %s33, %s533
          %s535 = smul.addr %s534, 16
          %s536 = scalar_lea.hbm %s6, %s535
          %s538 = sshll.u32 %s523, 4
          %s539 = int_to_ptr.vmem [resolvable:$true] %s538
          %541 = dma.vmem_to_hbm [thread:$0]  %s539, 16, %s536, %s521
        $region72: #{tpu_custom_call.1} parent=39 // pred_fallthru
          _
      $region40: #{tpu_custom_call.1} parent=5 // pred_fallthru
        _
      %p542 = scmp.le.s32.totalorder 2, %s23
      // Predicated region
      $region73: #{tpu_custom_call.1} parent=5 // pred_check
        %p543 = pneg %p542
      $region74: #{tpu_custom_call.1} parent=5 // pred_check_branch
        %545 = sbr.rel (%p543) target = $region76
      $region75: #{tpu_custom_call.1} parent=5 // pred_region
        %s546 = ssub.s32 %s23, 2
        // Predicated region
        $region77: #{tpu_custom_call.1} parent=75 // pred_check
          %p547 = pneg %p199
        $region78: #{tpu_custom_call.1} parent=75 // pred_check_branch
          %549 = sbr.rel (%p547) target = $region80
        $region79: #{tpu_custom_call.1} parent=75 // pred_region
          %p550 = scmp.lt.s32.totalorder %s34, 1
          %s551 = scalar_select %p550, %s34, 1
          %s552 = smul.addr %s551, 8
          %s553 = scalar_lea.vmem %s5, %s552
        $region80: #{tpu_custom_call.1} parent=75 // pred_fallthru
          _
        // Predicated region
        $region81: #{tpu_custom_call.1} parent=75 // pred_check
          %p554 = pneg %p227
        $region82: #{tpu_custom_call.1} parent=75 // pred_check_branch
          %556 = sbr.rel (%p554) target = $region84
        $region83: #{tpu_custom_call.1} parent=75 // pred_region
          %s557 = sand.u32 %s212, 1
          %s558 = scalar_lea.sflag [#allocation9], %s557
          %s559 = sand.u32 %s212, 1
          %s560 = scalar_lea.vmem [#allocation15], %s559
          %561 = dma.done %s558, 16
        $region84: #{tpu_custom_call.1} parent=75 // pred_fallthru
          _
      $region76: #{tpu_custom_call.1} parent=5 // pred_fallthru
        _
    $region6: #{tpu_custom_call.1} parent=1 // loop_footer
      %s27 = sadd.s32 1, %s23
    $region7: #{tpu_custom_call.1} parent=1 // loop_footer_branch
      %22 = sbr.rel target = $region3
    $region8: #{tpu_custom_call.1} parent=1 // loop_exit
      _
    %562 = vsyncpa [#allocation8], 1
    %s563 = scalar_lea.sflag [#allocation8], 1
    %564 = vsyncpa %s563, 1
    %565 = vsyncpa [#allocation13], 1
    %s566 = scalar_lea.sflag [#allocation13], 1
    %567 = vsyncpa %s566, 1
    %568 = vsyncpa [#allocation9], 1
    %s569 = scalar_lea.sflag [#allocation9], 1
    %570 = vsyncpa %s569, 1
    %571 = vsyncpa [#allocation10], 1
    %s572 = scalar_lea.sflag [#allocation10], 1
    %573 = vsyncpa %s572, 1

</llo_original>
